<compile_context>
chip_gen: v6e
topology: v6e:2x2x1
jax: 0.10.0
libtpu: 0.0.40
codegen_flags: <defaults>
</compile_context>

<pallas_src>
import math
import jax
import jax.numpy as jnp
from jax.experimental import pallas as pl
from jax.experimental.pallas import tpu as pltpu


# ----------------------------------------------------------------------------- helpers
def _round_up(x: int, m: int) -> int:
    return ((x + m - 1) // m) * m


def _vmem_budget_bytes() -> int:
    """Generation-aware VMEM budget (~75% of physical): ~96 MiB on v5e/v6e
    (128 MiB physical), ~48 MiB on v7x (64 MiB). Conservative fallback if the
    hardware query is unavailable."""
    try:
        cap = int(pltpu.get_tpu_info().vmem_capacity_bytes)
    except Exception:
        cap = 64 * 1024 * 1024
    return cap * 3 // 4


def _pick_tm(batch: int, in_f: int, out_f: int, out_pad: int,
             x_bytes: int, w_bytes: int, tm_max: int, vmem_budget: int) -> int:
    """Largest batch tile that fits the VMEM budget, with sublane packing for
    the streamed x dtype, >=2 (prefer even) tiles for large batches (v7x 2 TCs)."""
    sub = max(8, 32 // max(x_bytes, 1))            # 8 for f32, 16 for bf16, 32 for int8
    tm = min(tm_max, _round_up(max(batch, 1), sub))
    resident = out_pad * in_f * w_bytes + out_pad * 4   # W + bias, single-buffered
    while tm > sub:
        footprint = (2 * tm * in_f * x_bytes       # x tiles (double-buffered)
                     + 2 * tm * out_f * 4          # f32 output tiles (double-buffered)
                     + resident)
        if footprint <= vmem_budget:
            break
        tm = max(sub, ((tm // 2) // sub) * sub)
    # v7x has 2 TensorCores: make sure the "parallel" batch axis has >= 2 tiles
    # (and prefer an even count) once the batch is big enough to matter.
    if batch >= 256 and pl.cdiv(batch, tm) == 1:
        tm = _round_up(pl.cdiv(batch, 2), sub)
    n = pl.cdiv(batch, tm)
    if n > 1 and n % 2 == 1:
        cand = _round_up(pl.cdiv(batch, n + 1), sub)
        if cand >= sub and pl.cdiv(batch, cand) % 2 == 0:
            tm = cand
    return tm


# ----------------------------------------------------------------------------- kernel
def _popart_linear_kernel(x_ref, w_ref, b_ref, o_ref):
    # x_ref: (TM, IN)  incoming dtype     w_ref: (IN, OUT_pad) compute dtype
    # b_ref: (1, OUT_pad) f32             o_ref: (TM, OUT)     f32
    out_f = o_ref.shape[-1]
    x = x_ref[...].astype(w_ref.dtype)                      # in-kernel cast (VPU)
    y = jnp.dot(x, w_ref[...], preferred_element_type=jnp.float32)   # (TM, OUT_pad)
    y = y + b_ref[...]                                      # f32 bias add
    o_ref[...] = y[:, :out_f].astype(o_ref.dtype)           # unpadded store


# ----------------------------------------------------------------------------- wrapper
def prepare_popart_params(weight, bias, compute_dtype=jnp.bfloat16):
    """One-time prep (at init, not per call): pre-transpose W to (IN, OUT_pad)
    (lane-dense resident operand, plain MK x KN contraction) and cast to the
    streaming/compute dtype; bias stays f32."""
    out_f, in_f = weight.shape
    out_pad = _round_up(out_f, 128)
    w_t = jnp.zeros((in_f, out_pad), compute_dtype)
    w_t = w_t.at[:, :out_f].set(weight.T.astype(compute_dtype))
    b_pad = jnp.zeros((1, out_pad), jnp.float32)
    b_pad = b_pad.at[0, :out_f].set(bias.astype(jnp.float32))
    return dict(weight_t=w_t, bias=b_pad, out_features=out_f, in_features=in_f)


def popart_forward(x, prepared, *, tm_max=1024):
    """PopArt.forward: x @ W.T + b (f32 output). x: [..., IN], any leading dims."""
    w = prepared["weight_t"]          # (IN, OUT_pad), compute dtype
    b = prepared["bias"]              # (1, OUT_pad), f32
    out_f = prepared["out_features"]
    in_f = prepared["in_features"]
    out_pad = w.shape[1]

    lead = x.shape[:-1]
    x2 = x.reshape(-1, in_f)          # NO wrapper cast; cast happens in-kernel
    batch = x2.shape[0]

    vmem_budget = _vmem_budget_bytes()
    tm_eff = _pick_tm(batch, in_f, out_f, out_pad, x2.dtype.itemsize,
                      w.dtype.itemsize, tm_max, vmem_budget)
    n_tiles = pl.cdiv(batch, tm_eff)  # ragged tail handled by Pallas

    cost = pl.CostEstimate(
        flops=2 * batch * in_f * out_pad,
        transcendentals=0,
        bytes_accessed=(batch * in_f * x2.dtype.itemsize
                        + in_f * out_pad * w.dtype.itemsize
                        + out_pad * 4
                        + batch * out_f * 4),
    )

    out = pl.pallas_call(
        _popart_linear_kernel,
        out_shape=jax.ShapeDtypeStruct((batch, out_f), jnp.float32),
        grid_spec=pltpu.PrefetchScalarGridSpec(
            num_scalar_prefetch=0,
            grid=(n_tiles,),
            in_specs=[
                pl.BlockSpec((tm_eff, in_f), lambda i: (i, 0)),     # streamed x tile
                pl.BlockSpec((in_f, out_pad), lambda i: (0, 0),
                             pipeline_mode=pl.Buffered(1)),         # resident W
                pl.BlockSpec((1, out_pad), lambda i: (0, 0),
                             pipeline_mode=pl.Buffered(1)),         # resident bias
            ],
            out_specs=pl.BlockSpec((tm_eff, out_f), lambda i: (i, 0)),
        ),
        compiler_params=pltpu.CompilerParams(
            dimension_semantics=("parallel",),    # batch tiles are independent
            vmem_limit_bytes=vmem_budget,
        ),
        cost_estimate=cost,
    )(x2, w, b)

    return out.reshape(*lead, out_f)


# ----------------------------------------------------------------------------- init
def init_popart_params(key, input_shape, output_shape):
    """Deterministic re-implementation of PopArt.reset_parameters()."""
    k_w, k_b = jax.random.split(key)
    # kaiming_uniform_(weight, a=sqrt(5)): bound = sqrt(1/3)*sqrt(3/fan_in) = 1/sqrt(fan_in)
    fan_in = input_shape
    w_bound = math.sqrt(1.0 / 3.0) * math.sqrt(3.0 / fan_in)
    weight = jax.random.uniform(
        k_w, (output_shape, input_shape), jnp.float32, -w_bound, w_bound)
    b_bound = 1.0 / math.sqrt(fan_in)
    bias = jax.random.uniform(
        k_b, (output_shape,), jnp.float32, -b_bound, b_bound)
    # non-trainable running stats (unused by forward(), kept for completeness)
    stddev = jnp.ones((output_shape,), jnp.float32)
    mean = jnp.zeros((output_shape,), jnp.float32)
    mean_sq = jnp.zeros((output_shape,), jnp.float32)
    debiasing_term = jnp.zeros((), jnp.float32)
    return dict(weight=weight, bias=bias, stddev=stddev, mean=mean,
                mean_sq=mean_sq, debiasing_term=debiasing_term)


# ----------------------------------------------------------------------------- test
if __name__ == "__main__":
    IN_F, OUT_F = 32, 16
    key = jax.random.PRNGKey(0)
    k_params, k_x1, k_x2 = jax.random.split(key, 3)
    params = init_popart_params(k_params, IN_F, OUT_F)

    # --- case 1: small batch, f32 weights (matches F.linear float32 semantics)
    prep_f32 = prepare_popart_params(params["weight"], params["bias"], jnp.float32)
    x_small = jax.random.normal(k_x1, (8, IN_F), jnp.float32)
    out_small = jax.block_until_ready(popart_forward(x_small, prep_f32))
    ref_small = x_small @ params["weight"].T + params["bias"]
    assert out_small.shape == (8, OUT_F)
    assert out_small.dtype == jnp.float32
    assert jnp.allclose(out_small, ref_small, atol=1e-5, rtol=1e-5)

    # --- case 2: multi-tile batch with ragged tail, bf16 streaming (in-kernel x cast,
    #             f32 MXU accumulation, unpadded f32 output)
    prep_bf16 = prepare_popart_params(params["weight"], params["bias"], jnp.bfloat16)
    x_big = jax.random.normal(k_x2, (1030, IN_F), jnp.float32)
    out_big = jax.block_until_ready(popart_forward(x_big, prep_bf16, tm_max=1024))
    xb = x_big.astype(jnp.bfloat16).astype(jnp.float32)
    wb = params["weight"].astype(jnp.bfloat16).astype(jnp.float32)
    ref_big = xb @ wb.T + params["bias"]
    assert out_big.shape == (1030, OUT_F)
    assert jnp.allclose(out_big, ref_big, atol=1e-3, rtol=1e-3)

    print("KERNEL_OK")
</pallas_src>

<mosaic_0001>
module attributes {stable_mosaic.version = 11 : i64} {
  func.func @_popart_linear_kernel(%arg0: i32, %arg1: memref<8x32xf32, #tpu.memory_space<vmem>>, %arg2: memref<32x128xf32, #tpu.memory_space<vmem>>, %arg3: memref<1x128xf32, #tpu.memory_space<vmem>>, %arg4: memref<8x16xf32, #tpu.memory_space<vmem>>) attributes {dimension_semantics = [#tpu.dimension_semantics<parallel>], iteration_bounds = array<i64: 1>, scalar_prefetch = 0 : i64, scratch_operands = 0 : i64, tpu.core_type = #tpu.core_type<tc>, window_params = [{transform_indices = @transform_0, window_bounds = array<i64: 8, 32>}, {pipeline_mode = #tpu.pipeline_mode<synchronous>, transform_indices = @transform_1, window_bounds = array<i64: 32, 128>}, {pipeline_mode = #tpu.pipeline_mode<synchronous>, transform_indices = @transform_2, window_bounds = array<i64: 1, 128>}, {transform_indices = @transform_3, window_bounds = array<i64: 8, 16>}]} {
    %c0 = arith.constant 0 : index
    %c0_0 = arith.constant 0 : index
    %0 = vector.load %arg1[%c0, %c0_0] : memref<8x32xf32, #tpu.memory_space<vmem>>, vector<8x32xf32>
    %c0_1 = arith.constant 0 : index
    %c0_2 = arith.constant 0 : index
    %1 = vector.load %arg2[%c0_1, %c0_2] : memref<32x128xf32, #tpu.memory_space<vmem>>, vector<32x128xf32>
    %cst = arith.constant dense<0.000000e+00> : vector<8x128xf32>
    %2 = tpu.matmul %0, %1, %cst {dimension_numbers = #tpu.dot_dimension_numbers<[1], [0], [0], [1], [0, 0, 1, 1], [], []>} : vector<8x32xf32>, vector<32x128xf32>, vector<8x128xf32> -> vector<8x128xf32>
    %c0_3 = arith.constant 0 : index
    %c0_4 = arith.constant 0 : index
    %3 = vector.load %arg3[%c0_3, %c0_4] : memref<1x128xf32, #tpu.memory_space<vmem>>, vector<1x128xf32>
    %4 = vector.broadcast %3 : vector<1x128xf32> to vector<8x128xf32>
    %5 = arith.addf %2, %4 : vector<8x128xf32>
    %6 = vector.extract_strided_slice %5 {offsets = [0, 0], sizes = [8, 16], strides = [1, 1]} : vector<8x128xf32> to vector<8x16xf32>
    %c0_5 = arith.constant 0 : index
    %c0_6 = arith.constant 0 : index
    %7 = vector.load %arg4[%c0_5, %c0_6] : memref<8x16xf32, #tpu.memory_space<vmem>>, vector<8x16xf32>
    tpu.vector_store %arg4[%c0_5, %c0_6], %6 {strides = array<i32>} : memref<8x16xf32, #tpu.memory_space<vmem>>, vector<8x16xf32>,
    return
  }
  func.func @transform_0(%arg0: i32) -> (i32, i32) {
    %c0_i32 = arith.constant 0 : i32
    %c0_i32_0 = arith.constant 0 : i32
    return %arg0, %c0_i32 : i32, i32
  }
  func.func @transform_1(%arg0: i32) -> (i32, i32) {
    %c0_i32 = arith.constant 0 : i32
    %c0_i32_0 = arith.constant 0 : i32
    %c0_i32_1 = arith.constant 0 : i32
    return %c0_i32, %c0_i32_0 : i32, i32
  }
  func.func @transform_2(%arg0: i32) -> (i32, i32) {
    %c0_i32 = arith.constant 0 : i32
    %c0_i32_0 = arith.constant 0 : i32
    %c0_i32_1 = arith.constant 0 : i32
    return %c0_i32, %c0_i32_0 : i32, i32
  }
  func.func @transform_3(%arg0: i32) -> (i32, i32) {
    %c0_i32 = arith.constant 0 : i32
    %c0_i32_0 = arith.constant 0 : i32
    return %arg0, %c0_i32 : i32, i32
  }
}

</mosaic_0001>

<llo_original>
// kernel: tpu_custom_call.1
$region0: #{tpu_custom_call.1}
  #allocation0 [shape = 'u32[]', space=smem, size = 0x4, offset = 0x4, fixed_abs, tag = 'smem constant byte address 0x4 - core index']
  #allocation1 [shape = 'u32[144,128]{1,0:T(1,128)}', space=vmem, size = 0x12000, scoped, tag = 'internal scratch']
  %s0 = inlined_call_operand.hbm [shape: f32[8,32], index: 0, kind: input, shape index: {}]
  %s1 = inlined_call_operand.hbm [shape: f32[32,128], index: 1, kind: input, shape index: {}]
  %s2 = inlined_call_operand.vmem [shape: f32[1,128], index: 2, kind: input, shape index: {}]
  %s3 = inlined_call_operand.hbm [shape: f32[8,16], index: 3, kind: output, shape index: {}]
  %s4 = sld [smem:[#allocation0]]
  $region30: #{tpu_custom_call.1} parent=0
    _
  %s6 = ssub.s32 1, %s4
  %s7 = scalar_select 0, %s6, %s4
  $region1: #{tpu_custom_call.1} parent=0
    #allocation2 [shape = 'u8[4096]{0}', space=vmem, size = 0x1000, scoped, tag = 'input window, operand 0, single buffered']
    #allocation3 [shape = 's32[1]{0}', space=sflag, size = 0x4, scoped, tag = 'scoped memory for tpu_custom_call.1']
    #allocation4 [shape = 's32[1]{0}', space=sflag, size = 0x4, scoped, tag = 'scoped memory for tpu_custom_call.1']
    #allocation5 [shape = 'u8[16384]{0}', space=vmem, size = 0x4000, scoped, tag = 'input window, operand 1, single buffered']
    #allocation6 [shape = 's32[1]{0}', space=sflag, size = 0x4, scoped, tag = 'scoped memory for tpu_custom_call.1']
    #allocation7 [shape = 'u8[4096]{0}', space=vmem, size = 0x1000, scoped, tag = 'output window, operand 0, single buffered']
    %8 = vsyncpa [#allocation3], 0
    %9 = vsyncpa [#allocation6], 0
    %10 = vsyncpa [#allocation4], 0
    // Predicated region
    $region2: #{tpu_custom_call.1} parent=1 // pred_check
      _
    $region3: #{tpu_custom_call.1} parent=1 // pred_check_branch
      %12 = sbr.rel (0) target = $region5
    $region4: #{tpu_custom_call.1} parent=1 // pred_region
      %s14 = ssub.s32 128, 128
      %15 = vsyncadd [#allocation3], %s14
      %s17 = sshll.u32 [#allocation2], 4
      %s18 = int_to_ptr.vmem [resolvable:$true] %s17
      %20 = dma.hbm_to_vmem [thread:$0]  %s0, 128, %s18, [#allocation3]
    $region5: #{tpu_custom_call.1} parent=1 // pred_fallthru
      _
    // Predicated region
    $region6: #{tpu_custom_call.1} parent=1 // pred_check
      _
    $region7: #{tpu_custom_call.1} parent=1 // pred_check_branch
      %22 = sbr.rel (0) target = $region9
    $region8: #{tpu_custom_call.1} parent=1 // pred_region
      %s24 = ssub.s32 512, 512
      %25 = vsyncadd [#allocation6], %s24
      %s26 = sshll.u32 [#allocation5], 4
      %s27 = int_to_ptr.vmem [resolvable:$true] %s26
      %32 = dma.hbm_to_vmem [thread:$0]  %s1, 512, %s27, [#allocation6], 128, 128, 8
    $region9: #{tpu_custom_call.1} parent=1 // pred_fallthru
      _
    // Predicated region
    $region10: #{tpu_custom_call.1} parent=1 // pred_check
      _
    $region11: #{tpu_custom_call.1} parent=1 // pred_check_branch
      %34 = sbr.rel (0) target = $region13
    $region12: #{tpu_custom_call.1} parent=1 // pred_region
      _
    $region13: #{tpu_custom_call.1} parent=1 // pred_fallthru
      _
    // Predicated region
    $region14: #{tpu_custom_call.1} parent=1 // pred_check
      _
    $region15: #{tpu_custom_call.1} parent=1 // pred_check_branch
      %36 = sbr.rel (0) target = $region17
    $region16: #{tpu_custom_call.1} parent=1 // pred_region
      %37 = dma.done [#allocation3], 128
    $region17: #{tpu_custom_call.1} parent=1 // pred_fallthru
      _
    // Predicated region
    $region18: #{tpu_custom_call.1} parent=1 // pred_check
      _
    $region19: #{tpu_custom_call.1} parent=1 // pred_check_branch
      %39 = sbr.rel (0) target = $region21
    $region20: #{tpu_custom_call.1} parent=1 // pred_region
      %40 = dma.done [#allocation6], 512
    $region21: #{tpu_custom_call.1} parent=1 // pred_fallthru
      _
    %v41 = vld [vmem:[#allocation2] sm:$0xff]
    %v42 = vld [vmem:[#allocation5] sm:$0xff]
    %v43 = vld [vmem:[#allocation5 + $0x8] sm:$0xff]
    %v44 = vld [vmem:[#allocation5 + $0x10] sm:$0xff]
    %v45 = vld [vmem:[#allocation5 + $0x18] sm:$0xff]
    %v46 = vld [vmem:[%s2] sm:$0x1]
    %v48 = vlaneseq
    %v49 = vshrl.u32 %v48, 7
    %v50 = vsub.s32 0, %v49
    %v51 = vrot.slane %v46, %v50
    %vm53 = vcmask 261120
    %v55 = vsel %vm53, %v41, 0
    %57 = vmatprep.subr.mxu0 0.0
    %58 = vmatpush1.msra.mxu0 0.0
    %59 = vmatprep.subr.mxu0 0.0
    %60 = vmatpush1.msra.mxu0 0.0
    %61 = vmatprep.subr.mxu0 0.0
    %62 = vmatpush1.msra.mxu0 0.0
    %63 = vmatprep.subr.mxu0 0.0
    %64 = vmatpush1.msra.mxu0 0.0
    %65 = vmatprep.subr.mxu0 0.0
    %66 = vmatpush1.msra.mxu0 0.0
    %67 = vmatprep.subr.mxu0 0.0
    %68 = vmatpush1.msra.mxu0 0.0
    %69 = vmatprep.subr.mxu0 0.0
    %70 = vmatpush1.msra.mxu0 0.0
    %71 = vmatprep.subr.mxu0 0.0
    %72 = vmatpush1.msra.mxu0 0.0
    %73 = vmatprep.subr.mxu0 0.0
    %74 = vmatpush1.msra.mxu0 0.0
    %75 = vmatprep.subr.mxu0 0.0
    %76 = vmatpush1.msra.mxu0 0.0
    %77 = vmatprep.subr.mxu0 0.0
    %78 = vmatpush1.msra.mxu0 0.0
    %79 = vmatprep.subr.mxu0 0.0
    %80 = vmatpush1.msra.mxu0 0.0
    %81 = vmatprep.subr.mxu0 0.0
    %82 = vmatpush1.msra.mxu0 %v45
    %83 = vmatprep.subr.mxu0 0.0
    %84 = vmatpush1.msra.mxu0 %v44
    %85 = vmatprep.subr.mxu0 0.0
    %86 = vmatpush1.msra.mxu0 %v43
    %87 = vmatprep.subr.mxu0 0.0
    %88 = vmatpush1.msra.mxu0 %v42
    %89 = vmatprep.subr.mxu0 0.0
    %90 = vmatpush2.msra.mxu0 0.0
    %91 = vmatprep.subr.mxu0 0.0
    %92 = vmatpush2.msra.mxu0 0.0
    %93 = vmatprep.subr.mxu0 0.0
    %94 = vmatpush2.msra.mxu0 0.0
    %95 = vmatprep.subr.mxu0 0.0
    %96 = vmatpush2.msra.mxu0 0.0
    %97 = vmatprep.subr.mxu0 0.0
    %98 = vmatpush2.msra.mxu0 0.0
    %99 = vmatprep.subr.mxu0 0.0
    %100 = vmatpush2.msra.mxu0 0.0
    %101 = vmatprep.subr.mxu0 0.0
    %102 = vmatpush2.msra.mxu0 0.0
    %103 = vmatprep.subr.mxu0 0.0
    %104 = vmatpush2.msra.mxu0 0.0
    %105 = vmatprep.subr.mxu0 0.0
    %106 = vmatpush2.msra.mxu0 0.0
    %107 = vmatprep.subr.mxu0 0.0
    %108 = vmatpush2.msra.mxu0 0.0
    %109 = vmatprep.subr.mxu0 0.0
    %110 = vmatpush2.msra.mxu0 0.0
    %111 = vmatprep.subr.mxu0 0.0
    %112 = vmatpush2.msra.mxu0 0.0
    %113 = vmatprep.subr.mxu0 0.0
    %114 = vmatpush2.msra.mxu0 0.0
    %115 = vmatprep.subr.mxu0 0.0
    %116 = vmatpush2.msra.mxu0 0.0
    %117 = vmatprep.subr.mxu0 0.0
    %118 = vmatpush2.msra.mxu0 0.0
    %119 = vmatprep.subr.mxu0 0.0
    %120 = vmatpush2.msra.mxu0 0.0
    %121 = vmatprep.mubr.f32.mxu0 0.0
    %122 = vmatmul.mubr.f32.gmra.mxu0 %v55
    %v123 = vpop.f32.mrf.mxu0
    %v124 = vadd.f32 %v51, %v123
    %v125 = vpop.f32.mrf.mxu0
    %126 = vdwg.mxu0
    %vm127 = vcmask 130048
    %128 = vst.msk [vmem:[#allocation7] sm:$0xff] %vm127, %v124
    // Predicated region
    $region22: #{tpu_custom_call.1} parent=1 // pred_check
      _
    $region23: #{tpu_custom_call.1} parent=1 // pred_check_branch
      %130 = sbr.rel (0) target = $region25
    $region24: #{tpu_custom_call.1} parent=1 // pred_region
      %s132 = ssub.s32 128, 128
      %133 = vsyncadd [#allocation4], %s132
      %s135 = sshll.u32 [#allocation7], 4
      %s136 = int_to_ptr.vmem [resolvable:$true] %s135
      %138 = dma.vmem_to_hbm [thread:$0]  %s136, 128, %s3, [#allocation4]
    $region25: #{tpu_custom_call.1} parent=1 // pred_fallthru
      _
    // Predicated region
    $region26: #{tpu_custom_call.1} parent=1 // pred_check
      _
    $region27: #{tpu_custom_call.1} parent=1 // pred_check_branch
      %140 = sbr.rel (0) target = $region29
    $region28: #{tpu_custom_call.1} parent=1 // pred_region
      %141 = dma.done [#allocation4], 128
    $region29: #{tpu_custom_call.1} parent=1 // pred_fallthru
      _
    %142 = vsyncpa [#allocation3], 1
    %143 = vsyncpa [#allocation6], 1
    %144 = vsyncpa [#allocation4], 1

</llo_original>
